<compile_context>
chip_gen: v6e
topology: v6e:2x2x1
jax: 0.10.0
libtpu: 0.0.40
codegen_flags: <defaults>
</compile_context>

<pallas_src>
import jax
import jax.numpy as jnp
from jax.experimental import pallas as pl
from jax.experimental.pallas import tpu as pltpu


def _round_up(x, m):
    return ((x + m - 1) // m) * m


def _cdiv(a, b):
    return (a + b - 1) // b


_OUT_LANES = 8        # lanes 0-2 = logits, lane 3 = value, 4-7 = zero
_TB_CAP = 1024        # per-grid-step batch tile cap


def _actor_critic_kernel(x_ref, w_ref, b_ref, out_ref):
    # x_ref:   (TB, K1)        f32   (K1 = state_dim rounded up to 16)
    # w_ref:   (K1 + 384, 128) bf16  = [W1 ; W2 ; Wh1 ; Wh2] stacked on axis 0
    # b_ref:   (4, 128)        f32   = [b1 ; b2 ; bh1 ; bh2]
    # out_ref: (TB, 8)         f32   lanes 0-2 = logits, lane 3 = value
    k1 = w_ref.shape[0] - 384          # slab offsets come from the weight slab

    w1 = w_ref[0:k1, :]
    w2 = w_ref[k1:k1 + 128, :]
    wh1 = w_ref[k1 + 128:k1 + 256, :]
    wh2 = w_ref[k1 + 256:k1 + 384, :]

    b1 = b_ref[0:1, :]
    b2 = b_ref[1:2, :]
    bh1 = b_ref[2:3, :]
    bh2 = b_ref[3:4, :]

    x = x_ref[...].astype(jnp.bfloat16)

    # shared trunk: Linear -> ReLU -> Linear -> ReLU  (bf16 MXU, f32 accum)
    h = jnp.maximum(jnp.dot(x, w1, preferred_element_type=jnp.float32) + b1, 0.0)
    feats = jnp.maximum(
        jnp.dot(h.astype(jnp.bfloat16), w2, preferred_element_type=jnp.float32) + b2, 0.0)

    # fused heads, level 1: [policy_hidden | value_hidden] -> ReLU (exact fusion).
    hh = jnp.maximum(
        jnp.dot(feats.astype(jnp.bfloat16), wh1, preferred_element_type=jnp.float32) + bh1, 0.0)

    # fused heads, level 2: block-diagonal weight -> logits in lanes 0-2, value
    # in lane 3; only the first 8 lanes are written back.
    out = jnp.dot(hh.astype(jnp.bfloat16), wh2, preferred_element_type=jnp.float32) + bh2
    out_ref[...] = out[:, 0:_OUT_LANES].astype(out_ref.dtype)


def init_actor_critic_params(key, state_dim, dtype=jnp.float32):
    """PyTorch-style (uniform +/- 1/sqrt(fan_in)) init.

    Weights stored transposed relative to nn.Linear: shape (in, out).
    Biases stored as (1, out).
    """
    def linear(key, fan_in, fan_out):
        kw, kb = jax.random.split(key)
        bound = 1.0 / jnp.sqrt(jnp.asarray(fan_in, dtype=jnp.float32))
        w = jax.random.uniform(kw, (fan_in, fan_out), dtype, -bound, bound)
        b = jax.random.uniform(kb, (1, fan_out), dtype, -bound, bound)
        return w, b

    keys = jax.random.split(key, 6)
    params = {}
    params["w1"], params["b1"] = linear(keys[0], state_dim, 128)
    params["w2"], params["b2"] = linear(keys[1], 128, 128)
    params["wp1"], params["bp1"] = linear(keys[2], 128, 64)
    params["wp2"], params["bp2"] = linear(keys[3], 64, 3)
    params["wv1"], params["bv1"] = linear(keys[4], 128, 64)
    params["wv2"], params["bv2"] = linear(keys[5], 64, 1)
    return params


def pack_actor_critic_params(params, state_dim, weight_dtype=jnp.bfloat16):
    """Pack the 12 Linear params into one bf16 weight slab + one f32 bias slab.

    Returns:
      w_all: (K1 + 384, 128) bf16 -- [W1(K1,128); W2; Wh1; Wh2] rows,
             K1 = round_up(state_dim, 16) so every slab offset is bf16-tile aligned.
      b_all: (4, 128) f32 -- [b1; b2; bh1; bh2] rows.
    """
    k1 = _round_up(max(state_dim, 1), 16)

    # W1 zero-padded on the (unused) input rows.
    w1 = jnp.zeros((k1, 128), jnp.float32).at[:state_dim, :].set(params["w1"])

    # Head level 1: concat policy/value hidden weights side by side.
    wh1 = jnp.concatenate([params["wp1"], params["wv1"]], axis=1)          # (128,128)
    bh1 = jnp.concatenate([params["bp1"], params["bv1"]], axis=1)          # (1,128)

    # Head level 2: block-diagonal (policy rows 0-63 -> lanes 0-2,
    # value rows 64-127 -> lane 3), rest zero.
    wh2 = jnp.zeros((128, 128), jnp.float32)
    wh2 = wh2.at[0:64, 0:3].set(params["wp2"])
    wh2 = wh2.at[64:128, 3:4].set(params["wv2"])
    bh2 = jnp.zeros((1, 128), jnp.float32)
    bh2 = bh2.at[:, 0:3].set(params["bp2"])
    bh2 = bh2.at[:, 3:4].set(params["bv2"])

    w_all = jnp.concatenate([w1, params["w2"], wh1, wh2], axis=0).astype(weight_dtype)
    b_all = jnp.concatenate([params["b1"], params["b2"], bh1, bh2],
                            axis=0).astype(jnp.float32)                    # (4,128)
    return w_all, b_all


def actor_critic_forward(state, w_all, b_all):
    """Pallas forward: returns (logits (B,3), value (B,1))."""
    B, state_dim = state.shape
    k1 = w_all.shape[0] - 384

    # Balanced batch tiling: no 2x padding cliff just past the cap, and at
    # least 2 grid steps for large B so v7x's second TensorCore is used.
    n_steps = max(1, _cdiv(B, _TB_CAP))
    if B >= 2 * _TB_CAP // 2 and B > _TB_CAP // 2 * 2 - 1:  # i.e. B >= 1024
        n_steps = max(n_steps, 2)
    TB = _round_up(_cdiv(B, n_steps), 8)
    b_pad = _round_up(B, TB)

    # Pad only when actually required (batch remainder, or state_dim % 16 != 0).
    x = state
    if b_pad != B or k1 != state_dim:
        x = jnp.pad(state, ((0, b_pad - B), (0, k1 - state_dim)))

    out = pl.pallas_call(
        _actor_critic_kernel,
        out_shape=jax.ShapeDtypeStruct((b_pad, _OUT_LANES), jnp.float32),
        grid=(b_pad // TB,),
        in_specs=[
            pl.BlockSpec((TB, k1), lambda i: (i, 0)),         # x tile (native width)
            pl.BlockSpec(w_all.shape, lambda i: (0, 0)),      # weight slab (resident)
            pl.BlockSpec(b_all.shape, lambda i: (0, 0)),      # bias slab (resident)
        ],
        out_specs=pl.BlockSpec((TB, _OUT_LANES), lambda i: (i, 0)),  # narrow output slab
        compiler_params=pltpu.CompilerParams(
            dimension_semantics=("parallel",),                # shards across v7x TCs
        ),
    )(x, w_all, b_all)

    logits = out[:B, 0:3]
    value = out[:B, 3:4]
    return logits, value


def _reference_forward_bf16(state, params):
    """Plain-JAX reference with the SAME numerics as the kernel:
    bf16 matmul operands, f32 accumulation, f32 bias-add/ReLU, unfused heads."""
    def mm(a, w):
        return jnp.dot(a.astype(jnp.bfloat16), w.astype(jnp.bfloat16),
                       preferred_element_type=jnp.float32)

    h = jnp.maximum(mm(state, params["w1"]) + params["b1"], 0.0)
    feats = jnp.maximum(mm(h, params["w2"]) + params["b2"], 0.0)
    p = jnp.maximum(mm(feats, params["wp1"]) + params["bp1"], 0.0)
    logits = mm(p, params["wp2"]) + params["bp2"]
    v = jnp.maximum(mm(feats, params["wv1"]) + params["bv1"], 0.0)
    value = mm(v, params["wv2"]) + params["bv2"]
    return logits, value


if __name__ == "__main__":
    key = jax.random.PRNGKey(0)
    k_params, k_state = jax.random.split(key)

    batch = 8
    state_dim = 32

    params = init_actor_critic_params(k_params, state_dim)
    w_all, b_all = pack_actor_critic_params(params, state_dim)
    state = jax.random.normal(k_state, (batch, state_dim), dtype=jnp.float32)

    fwd = jax.jit(actor_critic_forward)
    logits, value = fwd(state, w_all, b_all)
    jax.block_until_ready((logits, value))

    ref_logits, ref_value = _reference_forward_bf16(state, params)
    assert logits.shape == (batch, 3) and value.shape == (batch, 1)
    assert jnp.allclose(logits, ref_logits, atol=2e-2, rtol=2e-2), (
        "logits mismatch vs bf16-matched reference")
    assert jnp.allclose(value, ref_value, atol=2e-2, rtol=2e-2), (
        "value mismatch vs bf16-matched reference")

    # TODO(synk): act()/evaluate() use Dirichlet sampling/log_prob/entropy
    # (torch.distributions); stochastic sampling is left to host-side JAX.

    print("KERNEL_OK")
</pallas_src>

<mosaic_0001>
module attributes {stable_mosaic.version = 11 : i64} {
  func.func @_actor_critic_kernel(%arg0: i32, %arg1: memref<8x32xf32, #tpu.memory_space<vmem>>, %arg2: memref<416x128xbf16, #tpu.memory_space<vmem>>, %arg3: memref<4x128xf32, #tpu.memory_space<vmem>>, %arg4: memref<8x8xf32, #tpu.memory_space<vmem>>) attributes {dimension_semantics = [#tpu.dimension_semantics<parallel>], iteration_bounds = array<i64: 1>, scalar_prefetch = 0 : i64, scratch_operands = 0 : i64, tpu.core_type = #tpu.core_type<tc>, window_params = [{transform_indices = @transform_0, window_bounds = array<i64: 8, 32>}, {pipeline_mode = #tpu.pipeline_mode<synchronous>, transform_indices = @transform_1, window_bounds = array<i64: 416, 128>}, {pipeline_mode = #tpu.pipeline_mode<synchronous>, transform_indices = @transform_2, window_bounds = array<i64: 4, 128>}, {transform_indices = @transform_3, window_bounds = array<i64: 8, 8>}]} {
    %c0 = arith.constant 0 : index
    %c0_0 = arith.constant 0 : index
    %0 = vector.load %arg2[%c0, %c0_0] : memref<416x128xbf16, #tpu.memory_space<vmem>>, vector<32x128xbf16>
    %c32 = arith.constant 32 : index
    %c0_1 = arith.constant 0 : index
    %1 = vector.load %arg2[%c32, %c0_1] : memref<416x128xbf16, #tpu.memory_space<vmem>>, vector<128x128xbf16>
    %c160 = arith.constant 160 : index
    %c0_2 = arith.constant 0 : index
    %2 = vector.load %arg2[%c160, %c0_2] : memref<416x128xbf16, #tpu.memory_space<vmem>>, vector<128x128xbf16>
    %c288 = arith.constant 288 : index
    %c0_3 = arith.constant 0 : index
    %3 = vector.load %arg2[%c288, %c0_3] : memref<416x128xbf16, #tpu.memory_space<vmem>>, vector<128x128xbf16>
    %c0_4 = arith.constant 0 : index
    %c0_5 = arith.constant 0 : index
    %4 = vector.load %arg3[%c0_4, %c0_5] : memref<4x128xf32, #tpu.memory_space<vmem>>, vector<1x128xf32>
    %c1 = arith.constant 1 : index
    %c0_6 = arith.constant 0 : index
    %5 = vector.load %arg3[%c1, %c0_6] : memref<4x128xf32, #tpu.memory_space<vmem>>, vector<1x128xf32>
    %c2 = arith.constant 2 : index
    %c0_7 = arith.constant 0 : index
    %6 = vector.load %arg3[%c2, %c0_7] : memref<4x128xf32, #tpu.memory_space<vmem>>, vector<1x128xf32>
    %c3 = arith.constant 3 : index
    %c0_8 = arith.constant 0 : index
    %7 = vector.load %arg3[%c3, %c0_8] : memref<4x128xf32, #tpu.memory_space<vmem>>, vector<1x128xf32>
    %c0_9 = arith.constant 0 : index
    %c0_10 = arith.constant 0 : index
    %8 = vector.load %arg1[%c0_9, %c0_10] : memref<8x32xf32, #tpu.memory_space<vmem>>, vector<8x32xf32>
    %9 = arith.truncf %8 : vector<8x32xf32> to vector<8x32xbf16>
    %cst = arith.constant dense<0.000000e+00> : vector<8x128xf32>
    %10 = tpu.matmul %9, %0, %cst {dimension_numbers = #tpu.dot_dimension_numbers<[1], [0], [0], [1], [0, 0, 1, 1], [], []>} : vector<8x32xbf16>, vector<32x128xbf16>, vector<8x128xf32> -> vector<8x128xf32>
    %11 = vector.broadcast %4 : vector<1x128xf32> to vector<8x128xf32>
    %12 = arith.addf %10, %11 : vector<8x128xf32>
    %cst_11 = arith.constant 0.000000e+00 : f32
    %13 = vector.broadcast %cst_11 : f32 to vector<8x128xf32>
    %14 = arith.maximumf %12, %13 : vector<8x128xf32>
    %15 = arith.truncf %14 : vector<8x128xf32> to vector<8x128xbf16>
    %cst_12 = arith.constant dense<0.000000e+00> : vector<8x128xf32>
    %16 = tpu.matmul %15, %1, %cst_12 {dimension_numbers = #tpu.dot_dimension_numbers<[1], [0], [0], [1], [0, 0, 1, 1], [], []>} : vector<8x128xbf16>, vector<128x128xbf16>, vector<8x128xf32> -> vector<8x128xf32>
    %17 = vector.broadcast %5 : vector<1x128xf32> to vector<8x128xf32>
    %18 = arith.addf %16, %17 : vector<8x128xf32>
    %cst_13 = arith.constant 0.000000e+00 : f32
    %19 = vector.broadcast %cst_13 : f32 to vector<8x128xf32>
    %20 = arith.maximumf %18, %19 : vector<8x128xf32>
    %21 = arith.truncf %20 : vector<8x128xf32> to vector<8x128xbf16>
    %cst_14 = arith.constant dense<0.000000e+00> : vector<8x128xf32>
    %22 = tpu.matmul %21, %2, %cst_14 {dimension_numbers = #tpu.dot_dimension_numbers<[1], [0], [0], [1], [0, 0, 1, 1], [], []>} : vector<8x128xbf16>, vector<128x128xbf16>, vector<8x128xf32> -> vector<8x128xf32>
    %23 = vector.broadcast %6 : vector<1x128xf32> to vector<8x128xf32>
    %24 = arith.addf %22, %23 : vector<8x128xf32>
    %cst_15 = arith.constant 0.000000e+00 : f32
    %25 = vector.broadcast %cst_15 : f32 to vector<8x128xf32>
    %26 = arith.maximumf %24, %25 : vector<8x128xf32>
    %27 = arith.truncf %26 : vector<8x128xf32> to vector<8x128xbf16>
    %cst_16 = arith.constant dense<0.000000e+00> : vector<8x128xf32>
    %28 = tpu.matmul %27, %3, %cst_16 {dimension_numbers = #tpu.dot_dimension_numbers<[1], [0], [0], [1], [0, 0, 1, 1], [], []>} : vector<8x128xbf16>, vector<128x128xbf16>, vector<8x128xf32> -> vector<8x128xf32>
    %29 = vector.broadcast %7 : vector<1x128xf32> to vector<8x128xf32>
    %30 = arith.addf %28, %29 : vector<8x128xf32>
    %31 = vector.extract_strided_slice %30 {offsets = [0, 0], sizes = [8, 8], strides = [1, 1]} : vector<8x128xf32> to vector<8x8xf32>
    %c0_17 = arith.constant 0 : index
    %c0_18 = arith.constant 0 : index
    %32 = vector.load %arg4[%c0_17, %c0_18] : memref<8x8xf32, #tpu.memory_space<vmem>>, vector<8x8xf32>
    tpu.vector_store %arg4[%c0_17, %c0_18], %31 {strides = array<i32>} : memref<8x8xf32, #tpu.memory_space<vmem>>, vector<8x8xf32>,
    return
  }
  func.func @transform_0(%arg0: i32) -> (i32, i32) {
    %c0_i32 = arith.constant 0 : i32
    %c0_i32_0 = arith.constant 0 : i32
    return %arg0, %c0_i32 : i32, i32
  }
  func.func @transform_1(%arg0: i32) -> (i32, i32) {
    %c0_i32 = arith.constant 0 : i32
    %c0_i32_0 = arith.constant 0 : i32
    %c0_i32_1 = arith.constant 0 : i32
    return %c0_i32, %c0_i32_0 : i32, i32
  }
  func.func @transform_2(%arg0: i32) -> (i32, i32) {
    %c0_i32 = arith.constant 0 : i32
    %c0_i32_0 = arith.constant 0 : i32
    %c0_i32_1 = arith.constant 0 : i32
    return %c0_i32, %c0_i32_0 : i32, i32
  }
  func.func @transform_3(%arg0: i32) -> (i32, i32) {
    %c0_i32 = arith.constant 0 : i32
    %c0_i32_0 = arith.constant 0 : i32
    return %arg0, %c0_i32 : i32, i32
  }
}

</mosaic_0001>

<llo_original>
// kernel: actor_critic_forward.1
$region0: #{actor_critic_forward.1}
  #allocation0 [shape = 'u32[]', space=smem, size = 0x4, offset = 0x4, fixed_abs, tag = 'smem constant byte address 0x4 - core index']
  #allocation1 [shape = 'u32[144,128]{1,0:T(1,128)}', space=vmem, size = 0x12000, scoped, tag = 'internal scratch']
  %s0 = inlined_call_operand.hbm [shape: f32[8,32], index: 0, kind: input, shape index: {}]
  %s1 = inlined_call_operand.hbm [shape: bf16[416,128], index: 1, kind: input, shape index: {}]
  %s2 = inlined_call_operand.hbm [shape: f32[4,128], index: 2, kind: input, shape index: {}]
  %s3 = inlined_call_operand.vmem [shape: f32[8,8], index: 3, kind: output, shape index: {}]
  %s4 = sld [smem:[#allocation0]]
  $region34: #{actor_critic_forward.1} parent=0
    _
  %s6 = ssub.s32 1, %s4
  %s7 = scalar_select 0, %s6, %s4
  $region1: #{actor_critic_forward.1} parent=0
    #allocation2 [shape = 'u8[4096]{0}', space=vmem, size = 0x1000, scoped, tag = 'input window, operand 0, single buffered']
    #allocation3 [shape = 's32[1]{0}', space=sflag, size = 0x4, scoped, tag = 'scoped memory for actor_critic_forward.1']
    #allocation4 [shape = 'u8[106496]{0}', space=vmem, size = 0x1a000, scoped, tag = 'input window, operand 1, single buffered']
    #allocation5 [shape = 's32[1]{0}', space=sflag, size = 0x4, scoped, tag = 'scoped memory for actor_critic_forward.1']
    #allocation6 [shape = 'u8[2048]{0}', space=vmem, size = 0x800, scoped, tag = 'input window, operand 2, single buffered']
    %8 = vsyncpa [#allocation3], 0
    %9 = vsyncpa [#allocation5], 0
    // Predicated region
    $region2: #{actor_critic_forward.1} parent=1 // pred_check
      _
    $region3: #{actor_critic_forward.1} parent=1 // pred_check_branch
      %11 = sbr.rel (0) target = $region5
    $region4: #{actor_critic_forward.1} parent=1 // pred_region
      %s13 = ssub.s32 128, 128
      %14 = vsyncadd [#allocation3], %s13
      %s16 = sshll.u32 [#allocation2], 4
      %s17 = int_to_ptr.vmem [resolvable:$true] %s16
      %19 = dma.hbm_to_vmem [thread:$0]  %s0, 128, %s17, [#allocation3]
    $region5: #{actor_critic_forward.1} parent=1 // pred_fallthru
      _
    // Predicated region
    $region6: #{actor_critic_forward.1} parent=1 // pred_check
      _
    $region7: #{actor_critic_forward.1} parent=1 // pred_check_branch
      %21 = sbr.rel (0) target = $region9
    $region8: #{actor_critic_forward.1} parent=1 // pred_region
      %s23 = ssub.s32 3328, 3328
      %24 = vsyncadd [#allocation5], %s23
      %s25 = sshll.u32 [#allocation4], 4
      %s26 = int_to_ptr.vmem [resolvable:$true] %s25
      %31 = dma.hbm_to_vmem [thread:$0]  %s1, 3328, %s26, [#allocation5], 64, 64, 4
    $region9: #{actor_critic_forward.1} parent=1 // pred_fallthru
      _
    // Predicated region
    $region10: #{actor_critic_forward.1} parent=1 // pred_check
      _
    $region11: #{actor_critic_forward.1} parent=1 // pred_check_branch
      %33 = sbr.rel (0) target = $region13
    $region12: #{actor_critic_forward.1} parent=1 // pred_region
      %s35 = ssub.s32 64, 64
      %36 = vsyncadd [#allocation5], %s35
      %s38 = sshll.u32 [#allocation6], 4
      %s39 = int_to_ptr.vmem [resolvable:$true] %s38
      %41 = dma.hbm_to_vmem [thread:$0]  %s2, 64, %s39, [#allocation5]
    $region13: #{actor_critic_forward.1} parent=1 // pred_fallthru
      _
    // Predicated region
    $region14: #{actor_critic_forward.1} parent=1 // pred_check
      _
    $region15: #{actor_critic_forward.1} parent=1 // pred_check_branch
      %43 = sbr.rel (0) target = $region17
    $region16: #{actor_critic_forward.1} parent=1 // pred_region
      %44 = dma.done [#allocation3], 128
    $region17: #{actor_critic_forward.1} parent=1 // pred_fallthru
      _
    // Predicated region
    $region18: #{actor_critic_forward.1} parent=1 // pred_check
      _
    $region19: #{actor_critic_forward.1} parent=1 // pred_check_branch
      %46 = sbr.rel (0) target = $region21
    $region20: #{actor_critic_forward.1} parent=1 // pred_region
      %47 = dma.done [#allocation5], 3328
    $region21: #{actor_critic_forward.1} parent=1 // pred_fallthru
      _
    // Predicated region
    $region22: #{actor_critic_forward.1} parent=1 // pred_check
      _
    $region23: #{actor_critic_forward.1} parent=1 // pred_check_branch
      %49 = sbr.rel (0) target = $region25
    $region24: #{actor_critic_forward.1} parent=1 // pred_region
      %50 = dma.done [#allocation5], 64
    $region25: #{actor_critic_forward.1} parent=1 // pred_fallthru
      _
    %v52 = vld [vmem:[#allocation4] sm:$0xf]
    %v53 = vld [vmem:[#allocation4 + $0x4] sm:$0xf]
    %v54 = vld [vmem:[#allocation4 + $0x8] sm:$0xf]
    %v55 = vld [vmem:[#allocation4 + $0xc] sm:$0xf]
    %v56 = vld [vmem:[#allocation4 + $0x10] sm:$0xf]
    %v57 = vld [vmem:[#allocation4 + $0x14] sm:$0xf]
    %v58 = vld [vmem:[#allocation4 + $0x18] sm:$0xf]
    %v59 = vld [vmem:[#allocation4 + $0x1c] sm:$0xf]
    %v60 = vld [vmem:[#allocation4 + $0x20] sm:$0xf]
    %v61 = vld [vmem:[#allocation4 + $0x24] sm:$0xf]
    %v62 = vld [vmem:[#allocation4 + $0x28] sm:$0xf]
    %v63 = vld [vmem:[#allocation4 + $0x2c] sm:$0xf]
    %v64 = vld [vmem:[#allocation4 + $0x30] sm:$0xf]
    %v65 = vld [vmem:[#allocation4 + $0x34] sm:$0xf]
    %v66 = vld [vmem:[#allocation4 + $0x38] sm:$0xf]
    %v67 = vld [vmem:[#allocation4 + $0x3c] sm:$0xf]
    %v68 = vld [vmem:[#allocation4 + $0x40] sm:$0xf]
    %v69 = vld [vmem:[#allocation4 + $0x44] sm:$0xf]
    %v70 = vld [vmem:[#allocation4 + $0x48] sm:$0xf]
    %v71 = vld [vmem:[#allocation4 + $0x4c] sm:$0xf]
    %v72 = vld [vmem:[#allocation4 + $0x50] sm:$0xf]
    %v73 = vld [vmem:[#allocation4 + $0x54] sm:$0xf]
    %v74 = vld [vmem:[#allocation4 + $0x58] sm:$0xf]
    %v75 = vld [vmem:[#allocation4 + $0x5c] sm:$0xf]
    %v76 = vld [vmem:[#allocation4 + $0x60] sm:$0xf]
    %v77 = vld [vmem:[#allocation4 + $0x64] sm:$0xf]
    %v78 = vld [vmem:[#allocation4 + $0x68] sm:$0xf]
    %v79 = vld [vmem:[#allocation4 + $0x6c] sm:$0xf]
    %v80 = vld [vmem:[#allocation4 + $0x70] sm:$0xf]
    %v81 = vld [vmem:[#allocation4 + $0x74] sm:$0xf]
    %v82 = vld [vmem:[#allocation4 + $0x78] sm:$0xf]
    %v83 = vld [vmem:[#allocation4 + $0x7c] sm:$0xf]
    %v84 = vld [vmem:[#allocation4 + $0x80] sm:$0xf]
    %v85 = vld [vmem:[#allocation4 + $0x84] sm:$0xf]
    %v86 = vld [vmem:[#allocation4 + $0x88] sm:$0xf]
    %v87 = vld [vmem:[#allocation4 + $0x8c] sm:$0xf]
    %v88 = vld [vmem:[#allocation4 + $0x90] sm:$0xf]
    %v89 = vld [vmem:[#allocation4 + $0x94] sm:$0xf]
    %v90 = vld [vmem:[#allocation4 + $0x98] sm:$0xf]
    %v91 = vld [vmem:[#allocation4 + $0x9c] sm:$0xf]
    %v92 = vld [vmem:[#allocation4 + $0xa0] sm:$0xf]
    %v93 = vld [vmem:[#allocation4 + $0xa4] sm:$0xf]
    %v94 = vld [vmem:[#allocation4 + $0xa8] sm:$0xf]
    %v95 = vld [vmem:[#allocation4 + $0xac] sm:$0xf]
    %v96 = vld [vmem:[#allocation4 + $0xb0] sm:$0xf]
    %v97 = vld [vmem:[#allocation4 + $0xb4] sm:$0xf]
    %v98 = vld [vmem:[#allocation4 + $0xb8] sm:$0xf]
    %v99 = vld [vmem:[#allocation4 + $0xbc] sm:$0xf]
    %v100 = vld [vmem:[#allocation4 + $0xc0] sm:$0xf]
    %v101 = vld [vmem:[#allocation4 + $0xc4] sm:$0xf]
    %v102 = vld [vmem:[#allocation4 + $0xc8] sm:$0xf]
    %v103 = vld [vmem:[#allocation4 + $0xcc] sm:$0xf]
    %v104 = vld [vmem:[#allocation6] sm:$0x1]
    %v105 = vld [vmem:[#allocation6 + $0x1] sm:$0x1]
    %v106 = vld [vmem:[#allocation6 + $0x2] sm:$0x1]
    %v107 = vld [vmem:[#allocation6 + $0x3] sm:$0x1]
    %v108 = vld [vmem:[#allocation2] sm:$0xff]
    %v109 = vpack.c.bf16 %v108, %v108
    %v110 = vlaneseq
    %v111 = vshrl.u32 %v110, 7
    %v112 = vsub.s32 0, %v111
    %v113 = vrot.slane %v104, %v112
    %v118 = vunpack.c.l.b16 %v52
    %v119 = vunpack.c.l.b16 %v53
    %v120 = vunpack.c.l.b16 %v54
    %v121 = vunpack.c.l.b16 %v55
    %v122 = vpack.c.b16 %v119, %v118
    %v123 = vpack.c.b16 %v121, %v120
    %vm126 = vcmask 261120
    %v128 = vsel %vm126, %v109, 0
    %130 = vmatprep.subr.bf16.mxu0 0
    %131 = vmatpush1.bf16.msra.mxu0 0
    %132 = vmatprep.subr.bf16.mxu0 0
    %133 = vmatpush1.bf16.msra.mxu0 0
    %134 = vmatprep.subr.bf16.mxu0 0
    %135 = vmatpush1.bf16.msra.mxu0 0
    %136 = vmatprep.subr.bf16.mxu0 0
    %137 = vmatpush1.bf16.msra.mxu0 0
    %138 = vmatprep.subr.bf16.mxu0 0
    %139 = vmatpush1.bf16.msra.mxu0 0
    %140 = vmatprep.subr.bf16.mxu0 0
    %141 = vmatpush1.bf16.msra.mxu0 0
    %142 = vmatprep.subr.bf16.mxu0 0
    %143 = vmatpush1.bf16.msra.mxu0 %v123
    %144 = vmatprep.subr.bf16.mxu0 0
    %145 = vmatpush1.bf16.msra.mxu0 %v122
    %146 = vmatprep.subr.bf16.mxu0 0
    %147 = vmatpush2.bf16.msra.mxu0 0
    %148 = vmatprep.subr.bf16.mxu0 0
    %149 = vmatpush2.bf16.msra.mxu0 0
    %150 = vmatprep.subr.bf16.mxu0 0
    %151 = vmatpush2.bf16.msra.mxu0 0
    %152 = vmatprep.subr.bf16.mxu0 0
    %153 = vmatpush2.bf16.msra.mxu0 0
    %154 = vmatprep.subr.bf16.mxu0 0
    %155 = vmatpush2.bf16.msra.mxu0 0
    %156 = vmatprep.subr.bf16.mxu0 0
    %157 = vmatpush2.bf16.msra.mxu0 0
    %158 = vmatprep.subr.bf16.mxu0 0
    %159 = vmatpush2.bf16.msra.mxu0 0
    %160 = vmatprep.subr.bf16.mxu0 0
    %161 = vmatpush2.bf16.msra.mxu0 0
    %162 = vmatprep.mubr.bf16.mxu0 0
    %163 = vmatmul.mubr.bf16.gmra.mxu0 %v128
    %v164 = vpop.f32.mrf.mxu0
    %v165 = vadd.f32 %v113, %v164
    %v166 = vpop.f32.mrf.mxu0
    %v167 = vpop.f32.mrf.mxu0
    %v168 = vpop.f32.mrf.mxu0
    %169 = vdwg.mxu0
    %v170 = vmax.f32 %v165, 0.0
    %v171 = vpack.c.bf16 %v170, %v170
    %v172 = vlaneseq
    %v173 = vshrl.u32 %v172, 7
    %v174 = vsub.s32 0, %v173
    %v175 = vrot.slane %v105, %v174
    %v192 = vunpack.c.l.b16 %v56
    %v193 = vunpack.c.l.b16 %v57
    %v194 = vunpack.c.l.b16 %v58
    %v195 = vunpack.c.l.b16 %v59
    %v196 = vunpack.c.l.b16 %v60
    %v197 = vunpack.c.l.b16 %v61
    %v198 = vunpack.c.l.b16 %v62
    %v199 = vunpack.c.l.b16 %v63
    %v200 = vunpack.c.l.b16 %v64
    %v201 = vunpack.c.l.b16 %v65
    %v202 = vunpack.c.l.b16 %v66
    %v203 = vunpack.c.l.b16 %v67
    %v204 = vunpack.c.l.b16 %v68
    %v205 = vunpack.c.l.b16 %v69
    %v206 = vunpack.c.l.b16 %v70
    %v207 = vunpack.c.l.b16 %v71
    %v208 = vpack.c.b16 %v193, %v192
    %v209 = vpack.c.b16 %v195, %v194
    %v210 = vpack.c.b16 %v197, %v196
    %v211 = vpack.c.b16 %v199, %v198
    %v212 = vpack.c.b16 %v201, %v200
    %v213 = vpack.c.b16 %v203, %v202
    %v214 = vpack.c.b16 %v205, %v204
    %v215 = vpack.c.b16 %v207, %v206
    %224 = vmatprep.subr.bf16.mxu0 0
    %225 = vmatpush1.bf16.msra.mxu0 %v215
    %226 = vmatprep.subr.bf16.mxu0 0
    %227 = vmatpush1.bf16.msra.mxu0 %v214
    %228 = vmatprep.subr.bf16.mxu0 0
    %229 = vmatpush1.bf16.msra.mxu0 %v213
    %230 = vmatprep.subr.bf16.mxu0 0
    %231 = vmatpush1.bf16.msra.mxu0 %v212
    %232 = vmatprep.subr.bf16.mxu0 0
    %233 = vmatpush1.bf16.msra.mxu0 %v211
    %234 = vmatprep.subr.bf16.mxu0 0
    %235 = vmatpush1.bf16.msra.mxu0 %v210
    %236 = vmatprep.subr.bf16.mxu0 0
    %237 = vmatpush1.bf16.msra.mxu0 %v209
    %238 = vmatprep.subr.bf16.mxu0 0
    %239 = vmatpush1.bf16.msra.mxu0 %v208
    %240 = vmatprep.subr.bf16.mxu0 0
    %241 = vmatpush2.bf16.msra.mxu0 0
    %242 = vmatprep.subr.bf16.mxu0 0
    %243 = vmatpush2.bf16.msra.mxu0 0
    %244 = vmatprep.subr.bf16.mxu0 0
    %245 = vmatpush2.bf16.msra.mxu0 0
    %246 = vmatprep.subr.bf16.mxu0 0
    %247 = vmatpush2.bf16.msra.mxu0 0
    %248 = vmatprep.subr.bf16.mxu0 0
    %249 = vmatpush2.bf16.msra.mxu0 0
    %250 = vmatprep.subr.bf16.mxu0 0
    %251 = vmatpush2.bf16.msra.mxu0 0
    %252 = vmatprep.subr.bf16.mxu0 0
    %253 = vmatpush2.bf16.msra.mxu0 0
    %254 = vmatprep.subr.bf16.mxu0 0
    %255 = vmatpush2.bf16.msra.mxu0 0
    %256 = vmatprep.mubr.bf16.mxu0 0
    %257 = vmatmul.mubr.bf16.gmra.mxu0 %v171
    %v258 = vpop.f32.mrf.mxu0
    %v259 = vadd.f32 %v175, %v258
    %v260 = vpop.f32.mrf.mxu0
    %v261 = vpop.f32.mrf.mxu0
    %v262 = vpop.f32.mrf.mxu0
    %263 = vdwg.mxu0
    %v264 = vmax.f32 %v259, 0.0
    %v265 = vpack.c.bf16 %v264, %v264
    %v266 = vlaneseq
    %v267 = vshrl.u32 %v266, 7
    %v268 = vsub.s32 0, %v267
    %v269 = vrot.slane %v106, %v268
    %v286 = vunpack.c.l.b16 %v72
    %v287 = vunpack.c.l.b16 %v73
    %v288 = vunpack.c.l.b16 %v74
    %v289 = vunpack.c.l.b16 %v75
    %v290 = vunpack.c.l.b16 %v76
    %v291 = vunpack.c.l.b16 %v77
    %v292 = vunpack.c.l.b16 %v78
    %v293 = vunpack.c.l.b16 %v79
    %v294 = vunpack.c.l.b16 %v80
    %v295 = vunpack.c.l.b16 %v81
    %v296 = vunpack.c.l.b16 %v82
    %v297 = vunpack.c.l.b16 %v83
    %v298 = vunpack.c.l.b16 %v84
    %v299 = vunpack.c.l.b16 %v85
    %v300 = vunpack.c.l.b16 %v86
    %v301 = vunpack.c.l.b16 %v87
    %v302 = vpack.c.b16 %v287, %v286
    %v303 = vpack.c.b16 %v289, %v288
    %v304 = vpack.c.b16 %v291, %v290
    %v305 = vpack.c.b16 %v293, %v292
    %v306 = vpack.c.b16 %v295, %v294
    %v307 = vpack.c.b16 %v297, %v296
    %v308 = vpack.c.b16 %v299, %v298
    %v309 = vpack.c.b16 %v301, %v300
    %318 = vmatprep.subr.bf16.mxu0 0
    %319 = vmatpush1.bf16.msra.mxu0 %v309
    %320 = vmatprep.subr.bf16.mxu0 0
    %321 = vmatpush1.bf16.msra.mxu0 %v308
    %322 = vmatprep.subr.bf16.mxu0 0
    %323 = vmatpush1.bf16.msra.mxu0 %v307
    %324 = vmatprep.subr.bf16.mxu0 0
    %325 = vmatpush1.bf16.msra.mxu0 %v306
    %326 = vmatprep.subr.bf16.mxu0 0
    %327 = vmatpush1.bf16.msra.mxu0 %v305
    %328 = vmatprep.subr.bf16.mxu0 0
    %329 = vmatpush1.bf16.msra.mxu0 %v304
    %330 = vmatprep.subr.bf16.mxu0 0
    %331 = vmatpush1.bf16.msra.mxu0 %v303
    %332 = vmatprep.subr.bf16.mxu0 0
    %333 = vmatpush1.bf16.msra.mxu0 %v302
    %334 = vmatprep.subr.bf16.mxu0 0
    %335 = vmatpush2.bf16.msra.mxu0 0
    %336 = vmatprep.subr.bf16.mxu0 0
    %337 = vmatpush2.bf16.msra.mxu0 0
    %338 = vmatprep.subr.bf16.mxu0 0
    %339 = vmatpush2.bf16.msra.mxu0 0
    %340 = vmatprep.subr.bf16.mxu0 0
    %341 = vmatpush2.bf16.msra.mxu0 0
    %342 = vmatprep.subr.bf16.mxu0 0
    %343 = vmatpush2.bf16.msra.mxu0 0
    %344 = vmatprep.subr.bf16.mxu0 0
    %345 = vmatpush2.bf16.msra.mxu0 0
    %346 = vmatprep.subr.bf16.mxu0 0
    %347 = vmatpush2.bf16.msra.mxu0 0
    %348 = vmatprep.subr.bf16.mxu0 0
    %349 = vmatpush2.bf16.msra.mxu0 0
    %350 = vmatprep.mubr.bf16.mxu0 0
    %351 = vmatmul.mubr.bf16.gmra.mxu0 %v265
    %v352 = vpop.f32.mrf.mxu0
    %v353 = vadd.f32 %v269, %v352
    %v354 = vpop.f32.mrf.mxu0
    %v355 = vpop.f32.mrf.mxu0
    %v356 = vpop.f32.mrf.mxu0
    %357 = vdwg.mxu0
    %v358 = vmax.f32 %v353, 0.0
    %v359 = vpack.c.bf16 %v358, %v358
    %v360 = vlaneseq
    %v361 = vshrl.u32 %v360, 7
    %v362 = vsub.s32 0, %v361
    %v363 = vrot.slane %v107, %v362
    %v380 = vunpack.c.l.b16 %v88
    %v381 = vunpack.c.l.b16 %v89
    %v382 = vunpack.c.l.b16 %v90
    %v383 = vunpack.c.l.b16 %v91
    %v384 = vunpack.c.l.b16 %v92
    %v385 = vunpack.c.l.b16 %v93
    %v386 = vunpack.c.l.b16 %v94
    %v387 = vunpack.c.l.b16 %v95
    %v388 = vunpack.c.l.b16 %v96
    %v389 = vunpack.c.l.b16 %v97
    %v390 = vunpack.c.l.b16 %v98
    %v391 = vunpack.c.l.b16 %v99
    %v392 = vunpack.c.l.b16 %v100
    %v393 = vunpack.c.l.b16 %v101
    %v394 = vunpack.c.l.b16 %v102
    %v395 = vunpack.c.l.b16 %v103
    %v396 = vpack.c.b16 %v381, %v380
    %v397 = vpack.c.b16 %v383, %v382
    %v398 = vpack.c.b16 %v385, %v384
    %v399 = vpack.c.b16 %v387, %v386
    %v400 = vpack.c.b16 %v389, %v388
    %v401 = vpack.c.b16 %v391, %v390
    %v402 = vpack.c.b16 %v393, %v392
    %v403 = vpack.c.b16 %v395, %v394
    %412 = vmatprep.subr.bf16.mxu0 0
    %413 = vmatpush1.bf16.msra.mxu0 %v403
    %414 = vmatprep.subr.bf16.mxu0 0
    %415 = vmatpush1.bf16.msra.mxu0 %v402
    %416 = vmatprep.subr.bf16.mxu0 0
    %417 = vmatpush1.bf16.msra.mxu0 %v401
    %418 = vmatprep.subr.bf16.mxu0 0
    %419 = vmatpush1.bf16.msra.mxu0 %v400
    %420 = vmatprep.subr.bf16.mxu0 0
    %421 = vmatpush1.bf16.msra.mxu0 %v399
    %422 = vmatprep.subr.bf16.mxu0 0
    %423 = vmatpush1.bf16.msra.mxu0 %v398
    %424 = vmatprep.subr.bf16.mxu0 0
    %425 = vmatpush1.bf16.msra.mxu0 %v397
    %426 = vmatprep.subr.bf16.mxu0 0
    %427 = vmatpush1.bf16.msra.mxu0 %v396
    %428 = vmatprep.subr.bf16.mxu0 0
    %429 = vmatpush2.bf16.msra.mxu0 0
    %430 = vmatprep.subr.bf16.mxu0 0
    %431 = vmatpush2.bf16.msra.mxu0 0
    %432 = vmatprep.subr.bf16.mxu0 0
    %433 = vmatpush2.bf16.msra.mxu0 0
    %434 = vmatprep.subr.bf16.mxu0 0
    %435 = vmatpush2.bf16.msra.mxu0 0
    %436 = vmatprep.subr.bf16.mxu0 0
    %437 = vmatpush2.bf16.msra.mxu0 0
    %438 = vmatprep.subr.bf16.mxu0 0
    %439 = vmatpush2.bf16.msra.mxu0 0
    %440 = vmatprep.subr.bf16.mxu0 0
    %441 = vmatpush2.bf16.msra.mxu0 0
    %442 = vmatprep.subr.bf16.mxu0 0
    %443 = vmatpush2.bf16.msra.mxu0 0
    %444 = vmatprep.mubr.bf16.mxu0 0
    %445 = vmatmul.mubr.bf16.gmra.mxu0 %v359
    %v446 = vpop.f32.mrf.mxu0
    %v447 = vadd.f32 %v363, %v446
    %v448 = vpop.f32.mrf.mxu0
    %v449 = vpop.f32.mrf.mxu0
    %v450 = vpop.f32.mrf.mxu0
    %451 = vdwg.mxu0
    %vm452 = vcmask 64512
    %453 = vst.msk [vmem:[%s3] sm:$0xff] %vm452, %v447
    // Predicated region
    $region26: #{actor_critic_forward.1} parent=1 // pred_check
      _
    $region27: #{actor_critic_forward.1} parent=1 // pred_check_branch
      %455 = sbr.rel (0) target = $region29
    $region28: #{actor_critic_forward.1} parent=1 // pred_region
      _
    $region29: #{actor_critic_forward.1} parent=1 // pred_fallthru
      _
    // Predicated region
    $region30: #{actor_critic_forward.1} parent=1 // pred_check
      _
    $region31: #{actor_critic_forward.1} parent=1 // pred_check_branch
      %457 = sbr.rel (0) target = $region33
    $region32: #{actor_critic_forward.1} parent=1 // pred_region
      _
    $region33: #{actor_critic_forward.1} parent=1 // pred_fallthru
      _
    %458 = vsyncpa [#allocation3], 1
    %459 = vsyncpa [#allocation5], 1

</llo_original>
